<compile_context>
chip_gen: v7x
topology: tpu7x:2x2x1
jax: 0.10.0
libtpu: 0.0.40
codegen_flags: <defaults>
</compile_context>

<pallas_src>
import functools

import jax
import jax.numpy as jnp
from jax import lax
from jax.experimental import pallas as pl
from jax.experimental.pallas import tpu as pltpu


def _round_up(v, m):
    return -(-v // m) * m


# -----------------------------------------------------------------------------
# Kernel 1: fused BatchNorm (affine form) + LSTM input projection over T*N rows
# -----------------------------------------------------------------------------
def _bn_input_proj_kernel(x_ref, scale_ref, shift_ref, w_ref, b_ref, o_ref,
                          *, compute_dtype):
    # x_ref: (tm, H)  scale/shift: (1, H)  w_ref: (tn, H)  b_ref: (1, tn)
    xn = x_ref[...].astype(jnp.float32) * scale_ref[...] + shift_ref[...]
    acc = lax.dot_general(
        xn.astype(compute_dtype), w_ref[...].astype(compute_dtype),
        dimension_numbers=(((1,), (1,)), ((), ())),   # contract H of both: x @ W^T w/o transpose copy
        preferred_element_type=jnp.float32)
    o_ref[...] = (acc + b_ref[...]).astype(o_ref.dtype)


def _bn_input_projection(x2, scale, shift, w_ih, bias, *, tm, tn, compute_dtype):
    M, H = x2.shape
    Nout = w_ih.shape[0]                      # 4 * hidden

    # Row tile: large by default; fall back to a small sublane multiple for tiny M.
    # bf16 MXU inputs pack 16 rows per sublane tile.
    sub = 16 if compute_dtype == jnp.bfloat16 else 8
    tm_eff = _round_up(min(tm, _round_up(M, sub)), sub)
    M_pad = _round_up(M, tm_eff)

    # Column tile: lane-dense multiple of 128 (unmasked vector stores).
    Nout_pad = _round_up(Nout, 128)
    tn_eff = 128
    for cand in (512, 256, 128):
        if cand <= max(tn, 128) and Nout_pad % cand == 0:
            tn_eff = cand
            break

    if M_pad != M:
        x2 = jnp.pad(x2, ((0, M_pad - M), (0, 0)))
    if Nout_pad != Nout:
        w_ih = jnp.pad(w_ih, ((0, Nout_pad - Nout), (0, 0)))
        bias = jnp.pad(bias, ((0, 0), (0, Nout_pad - Nout)))

    grid = (M_pad // tm_eff, Nout_pad // tn_eff)

    cost = pl.CostEstimate(
        flops=2 * M_pad * H * Nout_pad,
        transcendentals=0,
        bytes_accessed=(x2.size * x2.dtype.itemsize
                        + w_ih.size * w_ih.dtype.itemsize
                        + bias.size * bias.dtype.itemsize
                        + M_pad * Nout_pad * 4))

    out = pl.pallas_call(
        functools.partial(_bn_input_proj_kernel, compute_dtype=compute_dtype),
        out_shape=jax.ShapeDtypeStruct((M_pad, Nout_pad), jnp.float32),
        grid_spec=pltpu.PrefetchScalarGridSpec(
            num_scalar_prefetch=0,
            grid=grid,
            in_specs=[
                pl.BlockSpec((tm_eff, H), lambda i, j: (i, 0)),     # x row tile
                pl.BlockSpec((1, H), lambda i, j: (0, 0)),          # BN scale
                pl.BlockSpec((1, H), lambda i, j: (0, 0)),          # BN shift
                pl.BlockSpec((tn_eff, H), lambda i, j: (j, 0)),     # W_ih col tile
                pl.BlockSpec((1, tn_eff), lambda i, j: (0, j)),     # fused bias
            ],
            out_specs=pl.BlockSpec((tm_eff, tn_eff), lambda i, j: (i, j)),
        ),
        compiler_params=pltpu.CompilerParams(
            dimension_semantics=("parallel", "parallel"),
            vmem_limit_bytes=48 * 1024 * 1024),
        cost_estimate=cost,
    )(x2, scale, shift, w_ih, bias)

    return out[:M, :Nout]


# -----------------------------------------------------------------------------
# Kernel 2: sequential LSTM recurrence with packed-sequence (length) masking
# -----------------------------------------------------------------------------
def _lstm_recurrence_kernel(len_ref, xproj_ref, whh_ref,
                            out_ref, h_out_ref, c_out_ref,
                            h_sc, c_sc, *, hid, compute_dtype):
    t = pl.program_id(0)

    @pl.when(t == 0)
    def _():
        h_sc[...] = jnp.zeros_like(h_sc)
        c_sc[...] = jnp.zeros_like(c_sc)

    h_prev = h_sc[...]
    c_prev = c_sc[...]

    gates = xproj_ref[0] + lax.dot_general(
        h_prev.astype(compute_dtype), whh_ref[...].astype(compute_dtype),
        dimension_numbers=(((1,), (1,)), ((), ())),     # h @ W_hh^T without transpose
        preferred_element_type=jnp.float32)

    i = jax.nn.sigmoid(gates[:, 0 * hid:1 * hid])
    f = jax.nn.sigmoid(gates[:, 1 * hid:2 * hid])
    g = jnp.tanh(gates[:, 2 * hid:3 * hid])
    o = jax.nn.sigmoid(gates[:, 3 * hid:4 * hid])

    c_new = f * c_prev + i * g
    h_new = o * jnp.tanh(c_new)

    valid = t < len_ref[...]                   # (N, 1) bool, broadcasts over hid
    c_cur = jnp.where(valid, c_new, c_prev)
    h_cur = jnp.where(valid, h_new, h_prev)
    c_sc[...] = c_cur
    h_sc[...] = h_cur

    out_ref[0] = jnp.where(valid, h_cur, 0.0).astype(out_ref.dtype)
    h_out_ref[...] = h_cur.astype(h_out_ref.dtype)
    c_out_ref[...] = c_cur.astype(c_out_ref.dtype)


def _lstm_recurrence(xproj, lengths, w_hh, *, hid, out_dtype, compute_dtype):
    T, N, four_hid = xproj.shape

    cost = pl.CostEstimate(
        flops=2 * T * N * hid * four_hid + 10 * T * N * hid,
        transcendentals=5 * T * N * hid,
        bytes_accessed=(xproj.size * 4
                        + w_hh.size * w_hh.dtype.itemsize
                        + T * N * hid * 4))

    out, h_n, c_n = pl.pallas_call(
        functools.partial(_lstm_recurrence_kernel, hid=hid,
                          compute_dtype=compute_dtype),
        out_shape=(
            jax.ShapeDtypeStruct((T, N, hid), out_dtype),
            jax.ShapeDtypeStruct((N, hid), out_dtype),
            jax.ShapeDtypeStruct((N, hid), out_dtype),
        ),
        grid_spec=pltpu.PrefetchScalarGridSpec(
            num_scalar_prefetch=0,
            grid=(T,),
            in_specs=[
                pl.BlockSpec((N, 1), lambda t: (0, 0)),               # lengths
                pl.BlockSpec((1, N, four_hid), lambda t: (t, 0, 0)),  # per-step gate inputs
                pl.BlockSpec((four_hid, hid), lambda t: (0, 0)),      # W_hh (resident)
            ],
            out_specs=(
                pl.BlockSpec((1, N, hid), lambda t: (t, 0, 0)),
                pl.BlockSpec((N, hid), lambda t: (0, 0)),
                pl.BlockSpec((N, hid), lambda t: (0, 0)),
            ),
            scratch_shapes=[
                pltpu.VMEM((N, hid), jnp.float32),   # h state
                pltpu.VMEM((N, hid), jnp.float32),   # c state
            ],
        ),
        compiler_params=pltpu.CompilerParams(
            dimension_semantics=("arbitrary",),
            vmem_limit_bytes=48 * 1024 * 1024),
        cost_estimate=cost,
    )(lengths, xproj, w_hh)
    return out, h_n, c_n


# -----------------------------------------------------------------------------
# BatchRNN forward
# -----------------------------------------------------------------------------
def batch_rnn_forward(x, output_lengths, params, *, tm=256, tn=512,
                      eps=1e-5, compute_dtype=jnp.float32):
    """Forward of BatchRNN (SequenceWise BatchNorm1d + unidirectional LSTM).

    Returns (out, (h_n, c_n)):
      out: (T, N, hidden) with positions t >= output_lengths[n] zeroed
      h_n, c_n: (1, N, hidden) state at each sequence's last valid step.
    Set compute_dtype=jnp.bfloat16 on v6e/v7x to feed the MXU in bf16
    (f32 accumulation is kept via preferred_element_type).
    """
    T, N, H = x.shape
    w_ih = params["weight_ih"]            # (4*hid, H)   PyTorch layout
    w_hh = params["weight_hh"]            # (4*hid, hid) PyTorch layout
    hid = w_hh.shape[1]

    # SequenceWise(BatchNorm1d): training-mode batch statistics over the T*N rows.
    # The stats reduction is a tiny memory-bound op done in plain JAX; the
    # normalization itself (per-feature scale+shift) is fused into Kernel 1.
    x2 = x.reshape(T * N, H)
    mean = jnp.mean(x2, axis=0)
    var = jnp.mean(jnp.square(x2 - mean), axis=0)
    scale = (params["bn_gamma"] * lax.rsqrt(var + eps)).astype(jnp.float32)
    shift = (params["bn_beta"] - mean * scale).astype(jnp.float32)

    bias = (params["bias_ih"] + params["bias_hh"]).reshape(1, 4 * hid).astype(jnp.float32)

    # Kernel 1: gates_in = BN(x) @ W_ih^T + (b_ih + b_hh) over all T*N rows.
    xproj = _bn_input_projection(x2, scale.reshape(1, H), shift.reshape(1, H),
                                 w_ih, bias, tm=tm, tn=tn,
                                 compute_dtype=compute_dtype)
    xproj = xproj.reshape(T, N, 4 * hid)

    # Kernel 2: sequential recurrence with packed-sequence masking.
    lengths = output_lengths.astype(jnp.int32).reshape(N, 1)
    out, h_n, c_n = _lstm_recurrence(xproj, lengths, w_hh, hid=hid,
                                     out_dtype=x.dtype,
                                     compute_dtype=compute_dtype)

    # TODO(synk): bidirectional=True (reverse-direction pass + sum over directions)
    # is not implemented; the default BatchRNN is unidirectional.
    return out, (h_n[None], c_n[None])


if __name__ == "__main__":
    # Small shapes consistent with BatchRNN's (T, N, H) forward.
    T, N, H, HID = 8, 2, 32, 32

    key = jax.random.PRNGKey(0)
    ks = jax.random.split(key, 7)

    x = jax.random.normal(ks[0], (T, N, H), dtype=jnp.float32)
    output_lengths = jnp.array([T, T - 3], dtype=jnp.int32)

    params = dict(
        bn_gamma=1.0 + 0.1 * jax.random.normal(ks[1], (H,), dtype=jnp.float32),
        bn_beta=0.1 * jax.random.normal(ks[2], (H,), dtype=jnp.float32),
        weight_ih=0.1 * jax.random.normal(ks[3], (4 * HID, H), dtype=jnp.float32),
        weight_hh=0.1 * jax.random.normal(ks[4], (4 * HID, HID), dtype=jnp.float32),
        bias_ih=0.1 * jax.random.normal(ks[5], (4 * HID,), dtype=jnp.float32),
        bias_hh=0.1 * jax.random.normal(ks[6], (4 * HID,), dtype=jnp.float32),
    )

    out, (h_n, c_n) = batch_rnn_forward(x, output_lengths, params)
    jax.block_until_ready((out, h_n, c_n))

    # -------- pure-JAX reference (same semantics as the PyTorch module) --------
    def reference(x, lengths, p, eps=1e-5):
        T_, N_, H_ = x.shape
        hid = p["weight_hh"].shape[1]
        x2 = x.reshape(T_ * N_, H_)
        mean = x2.mean(0)
        var = ((x2 - mean) ** 2).mean(0)
        xbn = ((x2 - mean) / jnp.sqrt(var + eps) * p["bn_gamma"]
               + p["bn_beta"]).reshape(T_, N_, H_)
        h = jnp.zeros((N_, hid), jnp.float32)
        c = jnp.zeros((N_, hid), jnp.float32)
        outs = []
        for t in range(T_):
            gates = (xbn[t] @ p["weight_ih"].T + p["bias_ih"]
                     + h @ p["weight_hh"].T + p["bias_hh"])
            i = jax.nn.sigmoid(gates[:, :hid])
            f = jax.nn.sigmoid(gates[:, hid:2 * hid])
            g = jnp.tanh(gates[:, 2 * hid:3 * hid])
            o = jax.nn.sigmoid(gates[:, 3 * hid:])
            c_new = f * c + i * g
            h_new = o * jnp.tanh(c_new)
            valid = (t < lengths)[:, None]
            c = jnp.where(valid, c_new, c)
            h = jnp.where(valid, h_new, h)
            outs.append(jnp.where(valid, h, 0.0))
        return jnp.stack(outs), h, c

    ref_out, ref_h, ref_c = reference(x, output_lengths, params)

    assert out.shape == (T, N, HID)
    assert h_n.shape == (1, N, HID) and c_n.shape == (1, N, HID)
    assert jnp.allclose(out, ref_out, atol=1e-4, rtol=1e-4)
    assert jnp.allclose(h_n[0], ref_h, atol=1e-4, rtol=1e-4)
    assert jnp.allclose(c_n[0], ref_c, atol=1e-4, rtol=1e-4)

    print("KERNEL_OK")
</pallas_src>

<mosaic_0001>
module attributes {stable_mosaic.version = 11 : i64} {
  func.func @_bn_input_proj_kernel(%arg0: i32, %arg1: i32, %arg2: memref<16x32xf32, #tpu.memory_space<vmem>>, %arg3: memref<1x32xf32, #tpu.memory_space<vmem>>, %arg4: memref<1x32xf32, #tpu.memory_space<vmem>>, %arg5: memref<128x32xf32, #tpu.memory_space<vmem>>, %arg6: memref<1x128xf32, #tpu.memory_space<vmem>>, %arg7: memref<16x128xf32, #tpu.memory_space<vmem>>) attributes {dimension_semantics = [#tpu.dimension_semantics<parallel>, #tpu.dimension_semantics<parallel>], iteration_bounds = array<i64: 1, 1>, scalar_prefetch = 0 : i64, scratch_operands = 0 : i64, tpu.core_type = #tpu.core_type<tc>, window_params = [{transform_indices = @transform_0, window_bounds = array<i64: 16, 32>}, {pipeline_mode = #tpu.pipeline_mode<synchronous>, transform_indices = @transform_1, window_bounds = array<i64: 1, 32>}, {pipeline_mode = #tpu.pipeline_mode<synchronous>, transform_indices = @transform_2, window_bounds = array<i64: 1, 32>}, {transform_indices = @transform_3, window_bounds = array<i64: 128, 32>}, {transform_indices = @transform_4, window_bounds = array<i64: 1, 128>}, {transform_indices = @transform_5, window_bounds = array<i64: 16, 128>}]} {
    %c0 = arith.constant 0 : index
    %c0_0 = arith.constant 0 : index
    %0 = vector.load %arg2[%c0, %c0_0] : memref<16x32xf32, #tpu.memory_space<vmem>>, vector<16x32xf32>
    %c0_1 = arith.constant 0 : index
    %c0_2 = arith.constant 0 : index
    %1 = vector.load %arg3[%c0_1, %c0_2] : memref<1x32xf32, #tpu.memory_space<vmem>>, vector<1x32xf32>
    %2 = vector.broadcast %1 : vector<1x32xf32> to vector<16x32xf32>
    %3 = arith.mulf %0, %2 : vector<16x32xf32>
    %c0_3 = arith.constant 0 : index
    %c0_4 = arith.constant 0 : index
    %4 = vector.load %arg4[%c0_3, %c0_4] : memref<1x32xf32, #tpu.memory_space<vmem>>, vector<1x32xf32>
    %5 = vector.broadcast %4 : vector<1x32xf32> to vector<16x32xf32>
    %6 = arith.addf %3, %5 : vector<16x32xf32>
    %c0_5 = arith.constant 0 : index
    %c0_6 = arith.constant 0 : index
    %7 = vector.load %arg5[%c0_5, %c0_6] : memref<128x32xf32, #tpu.memory_space<vmem>>, vector<128x32xf32>
    %cst = arith.constant dense<0.000000e+00> : vector<16x128xf32>
    %8 = tpu.matmul %6, %7, %cst {dimension_numbers = #tpu.dot_dimension_numbers<[1], [1], [0], [0], [0, 0, 1, 0], [], []>} : vector<16x32xf32>, vector<128x32xf32>, vector<16x128xf32> -> vector<16x128xf32>
    %c0_7 = arith.constant 0 : index
    %c0_8 = arith.constant 0 : index
    %9 = vector.load %arg6[%c0_7, %c0_8] : memref<1x128xf32, #tpu.memory_space<vmem>>, vector<1x128xf32>
    %10 = vector.broadcast %9 : vector<1x128xf32> to vector<16x128xf32>
    %11 = arith.addf %8, %10 : vector<16x128xf32>
    %c0_9 = arith.constant 0 : index
    %c0_10 = arith.constant 0 : index
    %12 = vector.load %arg7[%c0_9, %c0_10] : memref<16x128xf32, #tpu.memory_space<vmem>>, vector<16x128xf32>
    tpu.vector_store %arg7[%c0_9, %c0_10], %11 {strides = array<i32>} : memref<16x128xf32, #tpu.memory_space<vmem>>, vector<16x128xf32>,
    return
  }
  func.func @transform_0(%arg0: i32, %arg1: i32) -> (i32, i32) {
    %c0_i32 = arith.constant 0 : i32
    %c0_i32_0 = arith.constant 0 : i32
    return %arg0, %c0_i32 : i32, i32
  }
  func.func @transform_1(%arg0: i32, %arg1: i32) -> (i32, i32) {
    %c0_i32 = arith.constant 0 : i32
    %c0_i32_0 = arith.constant 0 : i32
    %c0_i32_1 = arith.constant 0 : i32
    return %c0_i32, %c0_i32_0 : i32, i32
  }
  func.func @transform_2(%arg0: i32, %arg1: i32) -> (i32, i32) {
    %c0_i32 = arith.constant 0 : i32
    %c0_i32_0 = arith.constant 0 : i32
    %c0_i32_1 = arith.constant 0 : i32
    return %c0_i32, %c0_i32_0 : i32, i32
  }
  func.func @transform_3(%arg0: i32, %arg1: i32) -> (i32, i32) {
    %c0_i32 = arith.constant 0 : i32
    %c0_i32_0 = arith.constant 0 : i32
    return %arg1, %c0_i32 : i32, i32
  }
  func.func @transform_4(%arg0: i32, %arg1: i32) -> (i32, i32) {
    %c0_i32 = arith.constant 0 : i32
    %c0_i32_0 = arith.constant 0 : i32
    return %c0_i32, %arg1 : i32, i32
  }
  func.func @transform_5(%arg0: i32, %arg1: i32) -> (i32, i32) {
    %c0_i32 = arith.constant 0 : i32
    return %arg0, %arg1 : i32, i32
  }
}

</mosaic_0001>

<llo_original>
// kernel: tpu_custom_call.1
$region0: #{tpu_custom_call.1}
  #allocation0 [shape = 'u32[]', space=smem, size = 0x4, offset = 0x4, fixed_abs, tag = 'smem constant byte address 0x4 - core index']
  #allocation1 [shape = 'u32[144,128]{1,0:T(1,128)}', space=vmem, size = 0x12000, scoped, tag = 'internal scratch']
  %s0 = inlined_call_operand.vmem [shape: f32[16,32], index: 0, kind: input, shape index: {}]
  %s1 = inlined_call_operand.vmem [shape: f32[1,32], index: 1, kind: input, shape index: {}]
  %s2 = inlined_call_operand.vmem [shape: f32[1,32], index: 2, kind: input, shape index: {}]
  %s3 = inlined_call_operand.vmem [shape: f32[128,32], index: 3, kind: input, shape index: {}]
  %s4 = inlined_call_operand.vmem [shape: f32[1,128], index: 4, kind: input, shape index: {}]
  %s5 = inlined_call_operand.hbm [shape: f32[16,128], index: 5, kind: output, shape index: {}]
  %s6 = sld [smem:[#allocation0]]
  $region30: #{tpu_custom_call.1} parent=0
    _
  %s8 = ssub.s32 1, %s6
  %s9 = scalar_select 0, %s8, %s6
  $region1: #{tpu_custom_call.1} parent=0
    #allocation2 [shape = 'u8[8192]{0}', space=vmem, size = 0x2000, scoped, tag = 'output window, operand 0, single buffered']
    #allocation3 [shape = 's32[1]{0}', space=sflag, size = 0x4, scoped, tag = 'scoped memory for tpu_custom_call.1']
    %10 = vsyncpa [#allocation3], 0
    // Predicated region
    $region2: #{tpu_custom_call.1} parent=1 // pred_check
      _
    $region3: #{tpu_custom_call.1} parent=1 // pred_check_branch
      %12 = sbr.rel (0) target = $region5
    $region4: #{tpu_custom_call.1} parent=1 // pred_region
      _
    $region5: #{tpu_custom_call.1} parent=1 // pred_fallthru
      _
    // Predicated region
    $region6: #{tpu_custom_call.1} parent=1 // pred_check
      _
    $region7: #{tpu_custom_call.1} parent=1 // pred_check_branch
      %14 = sbr.rel (0) target = $region9
    $region8: #{tpu_custom_call.1} parent=1 // pred_region
      _
    $region9: #{tpu_custom_call.1} parent=1 // pred_fallthru
      _
    // Predicated region
    $region10: #{tpu_custom_call.1} parent=1 // pred_check
      _
    $region11: #{tpu_custom_call.1} parent=1 // pred_check_branch
      %16 = sbr.rel (0) target = $region13
    $region12: #{tpu_custom_call.1} parent=1 // pred_region
      _
    $region13: #{tpu_custom_call.1} parent=1 // pred_fallthru
      _
    // Predicated region
    $region14: #{tpu_custom_call.1} parent=1 // pred_check
      _
    $region15: #{tpu_custom_call.1} parent=1 // pred_check_branch
      %18 = sbr.rel (0) target = $region17
    $region16: #{tpu_custom_call.1} parent=1 // pred_region
      _
    $region17: #{tpu_custom_call.1} parent=1 // pred_fallthru
      _
    // Predicated region
    $region18: #{tpu_custom_call.1} parent=1 // pred_check
      _
    $region19: #{tpu_custom_call.1} parent=1 // pred_check_branch
      %20 = sbr.rel (0) target = $region21
    $region20: #{tpu_custom_call.1} parent=1 // pred_region
      _
    $region21: #{tpu_custom_call.1} parent=1 // pred_fallthru
      _
    %v21 = vld [vmem:[%s0] sm:$0xff]
    %v22 = vld [vmem:[%s0 + $0x8] sm:$0xff]
    %v23 = vld [vmem:[%s1] sm:$0x1]
    %v25 = vlaneseq
    %v26 = vshrl.u32 %v25, 7
    %v27 = vsub.s32 0, %v26
    %v28 = vrot.slane %v23, %v27
    %v30 = vmul.f32 %v21, %v28
    %v31 = vmul.f32 %v22, %v28
    %v32 = vld [vmem:[%s2] sm:$0x1]
    %v34 = vlaneseq
    %v35 = vshrl.u32 %v34, 7
    %v36 = vsub.s32 0, %v35
    %v37 = vrot.slane %v32, %v36
    %v39 = vadd.f32 %v30, %v37
    %v40 = vadd.f32 %v31, %v37
    %v41 = vld [vmem:[%s3] sm:$0xff]
    %v42 = vld [vmem:[%s3 + $0x8] sm:$0xff]
    %v43 = vld [vmem:[%s3 + $0x10] sm:$0xff]
    %v44 = vld [vmem:[%s3 + $0x18] sm:$0xff]
    %v45 = vld [vmem:[%s3 + $0x20] sm:$0xff]
    %v46 = vld [vmem:[%s3 + $0x28] sm:$0xff]
    %v47 = vld [vmem:[%s3 + $0x30] sm:$0xff]
    %v48 = vld [vmem:[%s3 + $0x38] sm:$0xff]
    %v49 = vld [vmem:[%s3 + $0x40] sm:$0xff]
    %v50 = vld [vmem:[%s3 + $0x48] sm:$0xff]
    %v51 = vld [vmem:[%s3 + $0x50] sm:$0xff]
    %v52 = vld [vmem:[%s3 + $0x58] sm:$0xff]
    %v53 = vld [vmem:[%s3 + $0x60] sm:$0xff]
    %v54 = vld [vmem:[%s3 + $0x68] sm:$0xff]
    %v55 = vld [vmem:[%s3 + $0x70] sm:$0xff]
    %v56 = vld [vmem:[%s3 + $0x78] sm:$0xff]
    %v57 = vld [vmem:[%s4] sm:$0x1]
    %v59 = vlaneseq
    %v60 = vshrl.u32 %v59, 7
    %v61 = vsub.s32 0, %v60
    %v62 = vrot.slane %v57, %v61
    %vm64 = vcmask 261120
    %v66 = vsel %vm64, %v39, 0
    %v69 = vsel %vm64, %v40, 0
    %v72 = vsel %vm64, %v41, 0
    %v75 = vsel %vm64, %v42, 0
    %v78 = vsel %vm64, %v43, 0
    %v81 = vsel %vm64, %v44, 0
    %v84 = vsel %vm64, %v45, 0
    %v87 = vsel %vm64, %v46, 0
    %v90 = vsel %vm64, %v47, 0
    %v93 = vsel %vm64, %v48, 0
    %v96 = vsel %vm64, %v49, 0
    %v99 = vsel %vm64, %v50, 0
    %v102 = vsel %vm64, %v51, 0
    %v105 = vsel %vm64, %v52, 0
    %v108 = vsel %vm64, %v53, 0
    %v111 = vsel %vm64, %v54, 0
    %v114 = vsel %vm64, %v55, 0
    %v117 = vsel %vm64, %v56, 0
    %119 = vmatprep.subr.mxu0 0.0
    %120 = vmatpush1.xpose.msra.mxu0 %v72
    %121 = vmatprep.subr.mxu0 0.0
    %122 = vmatpush1.xpose.msra.mxu0 %v75
    %123 = vmatprep.subr.mxu0 0.0
    %124 = vmatpush1.xpose.msra.mxu0 %v78
    %125 = vmatprep.subr.mxu0 0.0
    %126 = vmatpush1.xpose.msra.mxu0 %v81
    %127 = vmatprep.subr.mxu0 0.0
    %128 = vmatpush1.xpose.msra.mxu0 %v84
    %129 = vmatprep.subr.mxu0 0.0
    %130 = vmatpush1.xpose.msra.mxu0 %v87
    %131 = vmatprep.subr.mxu0 0.0
    %132 = vmatpush1.xpose.msra.mxu0 %v90
    %133 = vmatprep.subr.mxu0 0.0
    %134 = vmatpush1.xpose.msra.mxu0 %v93
    %135 = vmatprep.subr.mxu0 0.0
    %136 = vmatpush1.xpose.msra.mxu0 %v96
    %137 = vmatprep.subr.mxu0 0.0
    %138 = vmatpush1.xpose.msra.mxu0 %v99
    %139 = vmatprep.subr.mxu0 0.0
    %140 = vmatpush1.xpose.msra.mxu0 %v102
    %141 = vmatprep.subr.mxu0 0.0
    %142 = vmatpush1.xpose.msra.mxu0 %v105
    %143 = vmatprep.subr.mxu0 0.0
    %144 = vmatpush1.xpose.msra.mxu0 %v108
    %145 = vmatprep.subr.mxu0 0.0
    %146 = vmatpush1.xpose.msra.mxu0 %v111
    %147 = vmatprep.subr.mxu0 0.0
    %148 = vmatpush1.xpose.msra.mxu0 %v114
    %149 = vmatprep.subr.mxu0 0.0
    %150 = vmatpush1.xpose.msra.mxu0 %v117
    %151 = vmatprep.subr.mxu0 0.0
    %152 = vmatpush1.xpose.msra.mxu0 0.0
    %153 = vmatprep.subr.mxu0 0.0
    %154 = vmatpush1.xpose.msra.mxu0 0.0
    %155 = vmatprep.subr.mxu0 0.0
    %156 = vmatpush1.xpose.msra.mxu0 0.0
    %157 = vmatprep.subr.mxu0 0.0
    %158 = vmatpush1.xpose.msra.mxu0 0.0
    %159 = vmatprep.subr.mxu0 0.0
    %160 = vmatpush1.xpose.msra.mxu0 0.0
    %161 = vmatprep.subr.mxu0 0.0
    %162 = vmatpush1.xpose.msra.mxu0 0.0
    %163 = vmatprep.subr.mxu0 0.0
    %164 = vmatpush1.xpose.msra.mxu0 0.0
    %165 = vmatprep.subr.mxu0 0.0
    %166 = vmatpush1.xpose.msra.mxu0 0.0
    %167 = vmatprep.subr.mxu0 0.0
    %168 = vmatpush1.xpose.msra.mxu0 0.0
    %169 = vmatprep.subr.mxu0 0.0
    %170 = vmatpush1.xpose.msra.mxu0 0.0
    %171 = vmatprep.subr.mxu0 0.0
    %172 = vmatpush1.xpose.msra.mxu0 0.0
    %173 = vmatprep.subr.mxu0 0.0
    %174 = vmatpush1.xpose.msra.mxu0 0.0
    %175 = vmatprep.subr.mxu0 0.0
    %176 = vmatpush1.xpose.msra.mxu0 0.0
    %177 = vmatprep.subr.mxu0 0.0
    %178 = vmatpush1.xpose.msra.mxu0 0.0
    %179 = vmatprep.subr.mxu0 0.0
    %180 = vmatpush1.xpose.msra.mxu0 0.0
    %181 = vmatprep.subr.mxu0 0.0
    %182 = vmatpush1.xpose.msra.mxu0 0.0
    %183 = vmatprep.mubr.f32.mxu0 0.0
    %184 = vmatmul.mubr.f32.gmra.mrb[0].mxu0 %v66
    %v185 = vpop.f32.mrb[0].mxu0
    %v186 = vadd.f32 %v62, %v185
    %v187 = vpop.f32.mrb[0].mxu0
    %188 = vmatprep.mubr.f32.mxu0 0.0
    %189 = vmatmul.mubr.f32.gmra.mrb[0].mxu0 %v69
    %v190 = vpop.f32.mrb[0].mxu0
    %v191 = vadd.f32 %v62, %v190
    %v192 = vpop.f32.mrb[0].mxu0
    %193 = vdwg.mxu0
    %194 = vst [vmem:[#allocation2] sm:$0xff] %v186
    %195 = vst [vmem:[#allocation2 + $0x8] sm:$0xff] %v191
    // Predicated region
    $region22: #{tpu_custom_call.1} parent=1 // pred_check
      _
    $region23: #{tpu_custom_call.1} parent=1 // pred_check_branch
      %197 = sbr.rel (0) target = $region25
    $region24: #{tpu_custom_call.1} parent=1 // pred_region
      %s199 = ssub.s32 256, 256
      %200 = vsyncadd [#allocation3], %s199
      %s201 = sshll.u32 [#allocation2], 4
      %s202 = int_to_ptr.vmem [resolvable:$true] %s201
      %207 = dma.vmem_to_hbm [thread:$0]  %s202, 256, %s5, [#allocation3], 128, 128, 8
    $region25: #{tpu_custom_call.1} parent=1 // pred_fallthru
      _
    // Predicated region
    $region26: #{tpu_custom_call.1} parent=1 // pred_check
      _
    $region27: #{tpu_custom_call.1} parent=1 // pred_check_branch
      %209 = sbr.rel (0) target = $region29
    $region28: #{tpu_custom_call.1} parent=1 // pred_region
      %210 = dma.done [#allocation3], 256
    $region29: #{tpu_custom_call.1} parent=1 // pred_fallthru
      _
    %211 = vsyncpa [#allocation3], 1

</llo_original>
